<compile_context>
chip_gen: v7x
topology: tpu7x:2x2x1
jax: 0.10.0
libtpu: 0.0.40
codegen_flags: <defaults>
</compile_context>

<pallas_src>
import jax
import jax.numpy as jnp
import numpy as np
from jax.experimental import pallas as pl
from jax.experimental.pallas import tpu as pltpu

# ----------------------------- config (small) -----------------------------
HIDDEN = 64
INTERMEDIATE = 128


# --------------------------- Pallas kernels --------------------------------
def _gate_up_kernel(x_ref, w1_ref, w3_ref, h_ref, acc1_ref, acc3_ref):
    """Fused gate/up projection: h = silu(x @ W1) * (x @ W3)."""
    k = pl.program_id(2)

    @pl.when(k == 0)
    def _():
        acc1_ref[...] = jnp.zeros_like(acc1_ref)
        acc3_ref[...] = jnp.zeros_like(acc3_ref)

    x = x_ref[...]
    acc1_ref[...] += jnp.dot(x, w1_ref[...], preferred_element_type=jnp.float32)
    acc3_ref[...] += jnp.dot(x, w3_ref[...], preferred_element_type=jnp.float32)

    @pl.when(k == pl.num_programs(2) - 1)
    def _():
        g = acc1_ref[...]
        sig = 1.0 / (1.0 + jnp.exp(-g))          # exp on EUP slot
        h_ref[...] = (g * sig * acc3_ref[...]).astype(h_ref.dtype)


def _down_kernel(h_ref, w2_ref, y_ref, acc_ref):
    """Down projection: y = h @ W2 (tiled, f32 accumulator)."""
    k = pl.program_id(2)

    @pl.when(k == 0)
    def _():
        acc_ref[...] = jnp.zeros_like(acc_ref)

    acc_ref[...] += jnp.dot(h_ref[...], w2_ref[...],
                            preferred_element_type=jnp.float32)

    @pl.when(k == pl.num_programs(2) - 1)
    def _():
        y_ref[...] = acc_ref[...].astype(y_ref.dtype)


# ------------------------------ wrappers ------------------------------------
def _tiles(M, N, K, tm_max=256, tn_max=256, tk_max=512):
    """Tile caps sized for real shapes; clamp to the (small) problem size."""
    tm, tn, tk = min(tm_max, M), min(tn_max, N), min(tk_max, K)
    assert M % tm == 0 and N % tn == 0 and K % tk == 0, "shapes must tile evenly"
    return tm, tn, tk


_COMPILER_PARAMS = pltpu.CompilerParams(
    dimension_semantics=("parallel", "parallel", "arbitrary"),
    vmem_limit_bytes=32 * 1024 * 1024,   # safe budget on v5e/v6e/v7x
)


def gate_up_proj(x2d, w1, w3):
    """x2d: (M, K); w1/w3: (K, N)  ->  silu(x@w1) * (x@w3): (M, N)."""
    M, K = x2d.shape
    N = w1.shape[1]
    tm, tn, tk = _tiles(M, N, K)
    return pl.pallas_call(
        _gate_up_kernel,
        out_shape=jax.ShapeDtypeStruct((M, N), x2d.dtype),
        grid_spec=pltpu.PrefetchScalarGridSpec(
            num_scalar_prefetch=0,
            grid=(M // tm, N // tn, K // tk),
            in_specs=[
                pl.BlockSpec((tm, tk), lambda i, j, k: (i, k)),
                pl.BlockSpec((tk, tn), lambda i, j, k: (k, j)),
                pl.BlockSpec((tk, tn), lambda i, j, k: (k, j)),
            ],
            out_specs=pl.BlockSpec((tm, tn), lambda i, j, k: (i, j)),
            scratch_shapes=[
                pltpu.VMEM((tm, tn), jnp.float32),
                pltpu.VMEM((tm, tn), jnp.float32),
            ],
        ),
        compiler_params=_COMPILER_PARAMS,
    )(x2d, w1, w3)


def down_proj(h2d, w2):
    """h2d: (M, K); w2: (K, N)  ->  h2d @ w2: (M, N)."""
    M, K = h2d.shape
    N = w2.shape[1]
    tm, tn, tk = _tiles(M, N, K)
    return pl.pallas_call(
        _down_kernel,
        out_shape=jax.ShapeDtypeStruct((M, N), h2d.dtype),
        grid_spec=pltpu.PrefetchScalarGridSpec(
            num_scalar_prefetch=0,
            grid=(M // tm, N // tn, K // tk),
            in_specs=[
                pl.BlockSpec((tm, tk), lambda i, j, k: (i, k)),
                pl.BlockSpec((tk, tn), lambda i, j, k: (k, j)),
            ],
            out_specs=pl.BlockSpec((tm, tn), lambda i, j, k: (i, j)),
            scratch_shapes=[pltpu.VMEM((tm, tn), jnp.float32)],
        ),
        compiler_params=_COMPILER_PARAMS,
    )(h2d, w2)


def internlm2_mlp_forward(x, params, im_mask=None):
    """x: (B, S, HIDDEN).  Matches InternLM2MLP.forward with im_mask=None."""
    # TODO(synk): im_mask != None LoRA branch not implemented.
    assert im_mask is None
    B, S, H = x.shape
    x2d = x.reshape(B * S, H)
    h = gate_up_proj(x2d, params["w1"], params["w3"])   # (B*S, INTERMEDIATE)
    y = down_proj(h, params["w2"])                      # (B*S, HIDDEN)
    return y.reshape(B, S, H)


# ---------------------------- pure-JAX reference -----------------------------
def reference_forward(x, params):
    B, S, H = x.shape
    x2d = x.reshape(B * S, H)
    g = x2d @ params["w1"]
    u = x2d @ params["w3"]
    h = (g * jax.nn.sigmoid(g)) * u          # SiLU gate
    y = h @ params["w2"]
    return y.reshape(B, S, H)


# ---------------------------------- main -------------------------------------
if __name__ == "__main__":
    B, S = 2, 8
    key = jax.random.PRNGKey(0)
    k0, k1, k2, k3 = jax.random.split(key, 4)

    params = {
        # stored pre-transposed: (in_features, out_features); all bias=False
        "w1": jax.random.normal(k0, (HIDDEN, INTERMEDIATE), jnp.float32) * 0.05,
        "w3": jax.random.normal(k1, (HIDDEN, INTERMEDIATE), jnp.float32) * 0.05,
        "w2": jax.random.normal(k2, (INTERMEDIATE, HIDDEN), jnp.float32) * 0.05,
    }

    x = jax.random.normal(k3, (B, S, HIDDEN), jnp.float32)

    out = internlm2_mlp_forward(x, params, im_mask=None)
    out = jax.block_until_ready(out)

    ref = reference_forward(x, params)
    np.testing.assert_allclose(np.asarray(out), np.asarray(ref),
                               rtol=1e-4, atol=1e-4)

    print("KERNEL_OK")
</pallas_src>

<mosaic_0001>
module attributes {stable_mosaic.version = 11 : i64} {
  func.func @_gate_up_kernel(%arg0: i32, %arg1: i32, %arg2: i32, %arg3: memref<16x64xf32, #tpu.memory_space<vmem>>, %arg4: memref<64x128xf32, #tpu.memory_space<vmem>>, %arg5: memref<64x128xf32, #tpu.memory_space<vmem>>, %arg6: memref<16x128xf32, #tpu.memory_space<vmem>>, %arg7: memref<16x128xf32, #tpu.memory_space<vmem>>, %arg8: memref<16x128xf32, #tpu.memory_space<vmem>>) attributes {dimension_semantics = [#tpu.dimension_semantics<parallel>, #tpu.dimension_semantics<parallel>, #tpu.dimension_semantics<arbitrary>], iteration_bounds = array<i64: 1, 1, 1>, scalar_prefetch = 0 : i64, scratch_operands = 2 : i64, tpu.core_type = #tpu.core_type<tc>, window_params = [{transform_indices = @transform_0, window_bounds = array<i64: 16, 64>}, {transform_indices = @transform_1, window_bounds = array<i64: 64, 128>}, {transform_indices = @transform_2, window_bounds = array<i64: 64, 128>}, {transform_indices = @transform_3, window_bounds = array<i64: 16, 128>}]} {
    %c0_i32 = arith.constant 0 : i32
    %0 = arith.cmpi eq, %arg2, %c0_i32 : i32
    %1 = arith.extui %0 : i1 to i32
    %c0_i32_0 = arith.constant 0 : i32
    %2 = arith.cmpi ne, %1, %c0_i32_0 : i32
    scf.if %2 {
      %cst_17 = arith.constant 0.000000e+00 : f32
      %17 = vector.broadcast %cst_17 : f32 to vector<16x128xf32>
      %c0_18 = arith.constant 0 : index
      %c0_19 = arith.constant 0 : index
      %18 = vector.load %arg7[%c0_18, %c0_19] : memref<16x128xf32, #tpu.memory_space<vmem>>, vector<16x128xf32>
      tpu.vector_store %arg7[%c0_18, %c0_19], %17 {strides = array<i32>} : memref<16x128xf32, #tpu.memory_space<vmem>>, vector<16x128xf32>,
      %cst_20 = arith.constant 0.000000e+00 : f32
      %19 = vector.broadcast %cst_20 : f32 to vector<16x128xf32>
      %c0_21 = arith.constant 0 : index
      %c0_22 = arith.constant 0 : index
      %20 = vector.load %arg8[%c0_21, %c0_22] : memref<16x128xf32, #tpu.memory_space<vmem>>, vector<16x128xf32>
      tpu.vector_store %arg8[%c0_21, %c0_22], %19 {strides = array<i32>} : memref<16x128xf32, #tpu.memory_space<vmem>>, vector<16x128xf32>,
    } else {
    }
    %c0 = arith.constant 0 : index
    %c0_1 = arith.constant 0 : index
    %3 = vector.load %arg3[%c0, %c0_1] : memref<16x64xf32, #tpu.memory_space<vmem>>, vector<16x64xf32>
    %c0_2 = arith.constant 0 : index
    %c0_3 = arith.constant 0 : index
    %4 = vector.load %arg7[%c0_2, %c0_3] : memref<16x128xf32, #tpu.memory_space<vmem>>, vector<16x128xf32>
    %c0_4 = arith.constant 0 : index
    %c0_5 = arith.constant 0 : index
    %5 = vector.load %arg4[%c0_4, %c0_5] : memref<64x128xf32, #tpu.memory_space<vmem>>, vector<64x128xf32>
    %cst = arith.constant dense<0.000000e+00> : vector<16x128xf32>
    %6 = tpu.matmul %3, %5, %cst {dimension_numbers = #tpu.dot_dimension_numbers<[1], [0], [0], [1], [0, 0, 1, 1], [], []>} : vector<16x64xf32>, vector<64x128xf32>, vector<16x128xf32> -> vector<16x128xf32>
    %7 = arith.addf %4, %6 : vector<16x128xf32>
    %c0_6 = arith.constant 0 : index
    %c0_7 = arith.constant 0 : index
    %8 = vector.load %arg7[%c0_6, %c0_7] : memref<16x128xf32, #tpu.memory_space<vmem>>, vector<16x128xf32>
    tpu.vector_store %arg7[%c0_6, %c0_7], %7 {strides = array<i32>} : memref<16x128xf32, #tpu.memory_space<vmem>>, vector<16x128xf32>,
    %c0_8 = arith.constant 0 : index
    %c0_9 = arith.constant 0 : index
    %9 = vector.load %arg8[%c0_8, %c0_9] : memref<16x128xf32, #tpu.memory_space<vmem>>, vector<16x128xf32>
    %c0_10 = arith.constant 0 : index
    %c0_11 = arith.constant 0 : index
    %10 = vector.load %arg5[%c0_10, %c0_11] : memref<64x128xf32, #tpu.memory_space<vmem>>, vector<64x128xf32>
    %cst_12 = arith.constant dense<0.000000e+00> : vector<16x128xf32>
    %11 = tpu.matmul %3, %10, %cst_12 {dimension_numbers = #tpu.dot_dimension_numbers<[1], [0], [0], [1], [0, 0, 1, 1], [], []>} : vector<16x64xf32>, vector<64x128xf32>, vector<16x128xf32> -> vector<16x128xf32>
    %12 = arith.addf %9, %11 : vector<16x128xf32>
    %c0_13 = arith.constant 0 : index
    %c0_14 = arith.constant 0 : index
    %13 = vector.load %arg8[%c0_13, %c0_14] : memref<16x128xf32, #tpu.memory_space<vmem>>, vector<16x128xf32>
    tpu.vector_store %arg8[%c0_13, %c0_14], %12 {strides = array<i32>} : memref<16x128xf32, #tpu.memory_space<vmem>>, vector<16x128xf32>,
    %c0_i32_15 = arith.constant 0 : i32
    %14 = arith.cmpi eq, %arg2, %c0_i32_15 : i32
    %15 = arith.extui %14 : i1 to i32
    %c0_i32_16 = arith.constant 0 : i32
    %16 = arith.cmpi ne, %15, %c0_i32_16 : i32
    scf.if %16 {
      %c0_17 = arith.constant 0 : index
      %c0_18 = arith.constant 0 : index
      %17 = vector.load %arg7[%c0_17, %c0_18] : memref<16x128xf32, #tpu.memory_space<vmem>>, vector<16x128xf32>
      %cst_19 = arith.constant 0.000000e+00 : f32
      %18 = vector.broadcast %cst_19 : f32 to vector<16x128xf32>
      %19 = arith.subf %18, %17 : vector<16x128xf32>
      %20 = math.exp %19 : vector<16x128xf32>
      %cst_20 = arith.constant 1.000000e+00 : f32
      %21 = vector.broadcast %cst_20 : f32 to vector<16x128xf32>
      %22 = arith.addf %21, %20 : vector<16x128xf32>
      %cst_21 = arith.constant 1.000000e+00 : f32
      %23 = vector.broadcast %cst_21 : f32 to vector<16x128xf32>
      %24 = arith.divf %23, %22 : vector<16x128xf32>
      %25 = arith.mulf %17, %24 : vector<16x128xf32>
      %c0_22 = arith.constant 0 : index
      %c0_23 = arith.constant 0 : index
      %26 = vector.load %arg8[%c0_22, %c0_23] : memref<16x128xf32, #tpu.memory_space<vmem>>, vector<16x128xf32>
      %27 = arith.mulf %25, %26 : vector<16x128xf32>
      %c0_24 = arith.constant 0 : index
      %c0_25 = arith.constant 0 : index
      %28 = vector.load %arg6[%c0_24, %c0_25] : memref<16x128xf32, #tpu.memory_space<vmem>>, vector<16x128xf32>
      tpu.vector_store %arg6[%c0_24, %c0_25], %27 {strides = array<i32>} : memref<16x128xf32, #tpu.memory_space<vmem>>, vector<16x128xf32>,
    } else {
    }
    return
  }
  func.func @transform_0(%arg0: i32, %arg1: i32, %arg2: i32) -> (i32, i32) {
    %c0_i32 = arith.constant 0 : i32
    return %arg0, %arg2 : i32, i32
  }
  func.func @transform_1(%arg0: i32, %arg1: i32, %arg2: i32) -> (i32, i32) {
    %c0_i32 = arith.constant 0 : i32
    return %arg2, %arg1 : i32, i32
  }
  func.func @transform_2(%arg0: i32, %arg1: i32, %arg2: i32) -> (i32, i32) {
    %c0_i32 = arith.constant 0 : i32
    return %arg2, %arg1 : i32, i32
  }
  func.func @transform_3(%arg0: i32, %arg1: i32, %arg2: i32) -> (i32, i32) {
    %c0_i32 = arith.constant 0 : i32
    return %arg0, %arg1 : i32, i32
  }
}

</mosaic_0001>

<llo_original>
// kernel: tpu_custom_call.1
$region0: #{tpu_custom_call.1}
  #allocation0 [shape = 'u32[]', space=smem, size = 0x4, offset = 0x4, fixed_abs, tag = 'smem constant byte address 0x4 - core index']
  #allocation1 [shape = 'u32[144,128]{1,0:T(1,128)}', space=vmem, size = 0x12000, scoped, tag = 'internal scratch']
  #allocation2 [shape = 'f32[16,128]{1,0:T(8,128)}', space=vmem, size = 0x2000, scoped, tag = 'scratch operand']
  #allocation3 [shape = 'f32[16,128]{1,0:T(8,128)}', space=vmem, size = 0x2000, scoped, tag = 'scratch operand']
  %s0 = inlined_call_operand.hbm [shape: f32[16,64], index: 0, kind: input, shape index: {}]
  %s1 = inlined_call_operand.hbm [shape: f32[64,128], index: 1, kind: input, shape index: {}]
  %s2 = inlined_call_operand.hbm [shape: f32[64,128], index: 2, kind: input, shape index: {}]
  %s3 = inlined_call_operand.hbm [shape: f32[16,128], index: 3, kind: output, shape index: {}]
  %s4 = sld [smem:[#allocation0]]
  $region42: #{tpu_custom_call.1} parent=0
    _
  %s6 = ssub.s32 1, %s4
  %s7 = scalar_select 0, %s6, %s4
  $region1: #{tpu_custom_call.1} parent=0
    #allocation4 [shape = 'u8[8192]{0}', space=vmem, size = 0x2000, scoped, tag = 'input window, operand 0, single buffered']
    #allocation5 [shape = 's32[1]{0}', space=sflag, size = 0x4, scoped, tag = 'scoped memory for tpu_custom_call.1']
    #allocation6 [shape = 's32[1]{0}', space=sflag, size = 0x4, scoped, tag = 'scoped memory for tpu_custom_call.1']
    #allocation7 [shape = 'u8[32768]{0}', space=vmem, size = 0x8000, scoped, tag = 'input window, operand 1, single buffered']
    #allocation8 [shape = 's32[1]{0}', space=sflag, size = 0x4, scoped, tag = 'scoped memory for tpu_custom_call.1']
    #allocation9 [shape = 'u8[32768]{0}', space=vmem, size = 0x8000, scoped, tag = 'input window, operand 2, single buffered']
    #allocation10 [shape = 'u8[8192]{0}', space=vmem, size = 0x2000, scoped, tag = 'output window, operand 0, single buffered']
    %8 = vsyncpa [#allocation5], 0
    %9 = vsyncpa [#allocation8], 0
    %10 = vsyncpa [#allocation6], 0
    // Predicated region
    $region2: #{tpu_custom_call.1} parent=1 // pred_check
      _
    $region3: #{tpu_custom_call.1} parent=1 // pred_check_branch
      %12 = sbr.rel (0) target = $region5
    $region4: #{tpu_custom_call.1} parent=1 // pred_region
      %s14 = ssub.s32 256, 256
      %15 = vsyncadd [#allocation5], %s14
      %s16 = sshll.u32 [#allocation4], 4
      %s17 = int_to_ptr.vmem [resolvable:$true] %s16
      %22 = dma.hbm_to_vmem [thread:$0]  %s0, 256, %s17, [#allocation5], 128, 128, 8
    $region5: #{tpu_custom_call.1} parent=1 // pred_fallthru
      _
    // Predicated region
    $region6: #{tpu_custom_call.1} parent=1 // pred_check
      _
    $region7: #{tpu_custom_call.1} parent=1 // pred_check_branch
      %24 = sbr.rel (0) target = $region9
    $region8: #{tpu_custom_call.1} parent=1 // pred_region
      %s26 = ssub.s32 1024, 1024
      %27 = vsyncadd [#allocation8], %s26
      %s28 = sshll.u32 [#allocation7], 4
      %s29 = int_to_ptr.vmem [resolvable:$true] %s28
      %34 = dma.hbm_to_vmem [thread:$0]  %s1, 1024, %s29, [#allocation8], 128, 128, 8
    $region9: #{tpu_custom_call.1} parent=1 // pred_fallthru
      _
    // Predicated region
    $region10: #{tpu_custom_call.1} parent=1 // pred_check
      _
    $region11: #{tpu_custom_call.1} parent=1 // pred_check_branch
      %36 = sbr.rel (0) target = $region13
    $region12: #{tpu_custom_call.1} parent=1 // pred_region
      %s38 = ssub.s32 1024, 1024
      %39 = vsyncadd [#allocation8], %s38
      %s40 = sshll.u32 [#allocation9], 4
      %s41 = int_to_ptr.vmem [resolvable:$true] %s40
      %46 = dma.hbm_to_vmem [thread:$0]  %s2, 1024, %s41, [#allocation8], 128, 128, 8
    $region13: #{tpu_custom_call.1} parent=1 // pred_fallthru
      _
    // Predicated region
    $region14: #{tpu_custom_call.1} parent=1 // pred_check
      _
    $region15: #{tpu_custom_call.1} parent=1 // pred_check_branch
      %48 = sbr.rel (0) target = $region17
    $region16: #{tpu_custom_call.1} parent=1 // pred_region
      %49 = dma.done [#allocation5], 256
    $region17: #{tpu_custom_call.1} parent=1 // pred_fallthru
      _
    // Predicated region
    $region18: #{tpu_custom_call.1} parent=1 // pred_check
      _
    $region19: #{tpu_custom_call.1} parent=1 // pred_check_branch
      %51 = sbr.rel (0) target = $region21
    $region20: #{tpu_custom_call.1} parent=1 // pred_region
      %52 = dma.done [#allocation8], 1024
    $region21: #{tpu_custom_call.1} parent=1 // pred_fallthru
      _
    // Predicated region
    $region22: #{tpu_custom_call.1} parent=1 // pred_check
      _
    $region23: #{tpu_custom_call.1} parent=1 // pred_check_branch
      %54 = sbr.rel (0) target = $region25
    $region24: #{tpu_custom_call.1} parent=1 // pred_region
      %55 = dma.done [#allocation8], 1024
    $region25: #{tpu_custom_call.1} parent=1 // pred_fallthru
      _
    %p56 = scmp.eq.s32.totalorder 0, 0
    // Predicated region
    $region26: #{tpu_custom_call.1} parent=1 // pred_check
      %p57 = pneg %p56
    $region27: #{tpu_custom_call.1} parent=1 // pred_check_branch
      %59 = sbr.rel (%p57) target = $region29
    $region28: #{tpu_custom_call.1} parent=1 // pred_region
      %60 = vst [vmem:[#allocation2] sm:$0xff] 0.0
      %61 = vst [vmem:[#allocation2 + $0x8] sm:$0xff] 0.0
      %62 = vst [vmem:[#allocation3] sm:$0xff] 0.0
      %63 = vst [vmem:[#allocation3 + $0x8] sm:$0xff] 0.0
    $region29: #{tpu_custom_call.1} parent=1 // pred_fallthru
      _
    %v64 = vld [vmem:[#allocation4] sm:$0xff]
    %v65 = vld [vmem:[#allocation4 + $0x8] sm:$0xff]
    %v66 = vld [vmem:[#allocation2] sm:$0xff]
    %v67 = vld [vmem:[#allocation2 + $0x8] sm:$0xff]
    %v68 = vld [vmem:[#allocation7] sm:$0xff]
    %v69 = vld [vmem:[#allocation7 + $0x8] sm:$0xff]
    %v70 = vld [vmem:[#allocation7 + $0x10] sm:$0xff]
    %v71 = vld [vmem:[#allocation7 + $0x18] sm:$0xff]
    %v72 = vld [vmem:[#allocation7 + $0x20] sm:$0xff]
    %v73 = vld [vmem:[#allocation7 + $0x28] sm:$0xff]
    %v74 = vld [vmem:[#allocation7 + $0x30] sm:$0xff]
    %v75 = vld [vmem:[#allocation7 + $0x38] sm:$0xff]
    %vm76 = vcmask 523264
    %v78 = vsel %vm76, %v64, 0
    %v81 = vsel %vm76, %v65, 0
    %83 = vmatprep.subr.mxu0 0.0
    %84 = vmatpush1.msra.mxu0 %v68
    %85 = vmatprep.subr.mxu0 0.0
    %86 = vmatpush1.msra.mxu0 %v69
    %87 = vmatprep.subr.mxu0 0.0
    %88 = vmatpush1.msra.mxu0 %v70
    %89 = vmatprep.subr.mxu0 0.0
    %90 = vmatpush1.msra.mxu0 %v71
    %91 = vmatprep.subr.mxu0 0.0
    %92 = vmatpush1.msra.mxu0 %v72
    %93 = vmatprep.subr.mxu0 0.0
    %94 = vmatpush1.msra.mxu0 %v73
    %95 = vmatprep.subr.mxu0 0.0
    %96 = vmatpush1.msra.mxu0 %v74
    %97 = vmatprep.subr.mxu0 0.0
    %98 = vmatpush1.msra.mxu0 %v75
    %99 = vmatprep.subr.mxu0 0.0
    %100 = vmatpush1.msra.mxu0 0.0
    %101 = vmatprep.subr.mxu0 0.0
    %102 = vmatpush1.msra.mxu0 0.0
    %103 = vmatprep.subr.mxu0 0.0
    %104 = vmatpush1.msra.mxu0 0.0
    %105 = vmatprep.subr.mxu0 0.0
    %106 = vmatpush1.msra.mxu0 0.0
    %107 = vmatprep.subr.mxu0 0.0
    %108 = vmatpush1.msra.mxu0 0.0
    %109 = vmatprep.subr.mxu0 0.0
    %110 = vmatpush1.msra.mxu0 0.0
    %111 = vmatprep.subr.mxu0 0.0
    %112 = vmatpush1.msra.mxu0 0.0
    %113 = vmatprep.subr.mxu0 0.0
    %114 = vmatpush1.msra.mxu0 0.0
    %115 = vmatprep.subr.mxu0 0.0
    %116 = vmatpush1.msra.mxu0 0.0
    %117 = vmatprep.subr.mxu0 0.0
    %118 = vmatpush1.msra.mxu0 0.0
    %119 = vmatprep.subr.mxu0 0.0
    %120 = vmatpush1.msra.mxu0 0.0
    %121 = vmatprep.subr.mxu0 0.0
    %122 = vmatpush1.msra.mxu0 0.0
    %123 = vmatprep.subr.mxu0 0.0
    %124 = vmatpush1.msra.mxu0 0.0
    %125 = vmatprep.subr.mxu0 0.0
    %126 = vmatpush1.msra.mxu0 0.0
    %127 = vmatprep.subr.mxu0 0.0
    %128 = vmatpush1.msra.mxu0 0.0
    %129 = vmatprep.subr.mxu0 0.0
    %130 = vmatpush1.msra.mxu0 0.0
    %131 = vmatprep.subr.mxu0 0.0
    %132 = vmatpush1.msra.mxu0 0.0
    %133 = vmatprep.subr.mxu0 0.0
    %134 = vmatpush1.msra.mxu0 0.0
    %135 = vmatprep.subr.mxu0 0.0
    %136 = vmatpush1.msra.mxu0 0.0
    %137 = vmatprep.subr.mxu0 0.0
    %138 = vmatpush1.msra.mxu0 0.0
    %139 = vmatprep.subr.mxu0 0.0
    %140 = vmatpush1.msra.mxu0 0.0
    %141 = vmatprep.subr.mxu0 0.0
    %142 = vmatpush1.msra.mxu0 0.0
    %143 = vmatprep.subr.mxu0 0.0
    %144 = vmatpush1.msra.mxu0 0.0
    %145 = vmatprep.subr.mxu0 0.0
    %146 = vmatpush1.msra.mxu0 0.0
    %147 = vmatprep.mubr.f32.mxu0 0.0
    %148 = vmatmul.mubr.f32.gmra.mrb[0].mxu0 %v78
    %v149 = vpop.f32.mrb[0].mxu0
    %v150 = vadd.f32 0.0, %v149
    %v151 = vpop.f32.mrb[0].mxu0
    %152 = vmatprep.mubr.f32.mxu0 0.0
    %153 = vmatmul.mubr.f32.gmra.mrb[0].mxu0 %v81
    %v154 = vpop.f32.mrb[0].mxu0
    %v155 = vadd.f32 0.0, %v154
    %v156 = vpop.f32.mrb[0].mxu0
    %157 = vdwg.mxu0
    %v158 = vadd.f32 %v66, %v150
    %v159 = vadd.f32 %v67, %v155
    %160 = vst [vmem:[#allocation2] sm:$0xff] %v158
    %161 = vst [vmem:[#allocation2 + $0x8] sm:$0xff] %v159
    %v162 = vld [vmem:[#allocation3] sm:$0xff]
    %v163 = vld [vmem:[#allocation3 + $0x8] sm:$0xff]
    %v164 = vld [vmem:[#allocation9] sm:$0xff]
    %v165 = vld [vmem:[#allocation9 + $0x8] sm:$0xff]
    %v166 = vld [vmem:[#allocation9 + $0x10] sm:$0xff]
    %v167 = vld [vmem:[#allocation9 + $0x18] sm:$0xff]
    %v168 = vld [vmem:[#allocation9 + $0x20] sm:$0xff]
    %v169 = vld [vmem:[#allocation9 + $0x28] sm:$0xff]
    %v170 = vld [vmem:[#allocation9 + $0x30] sm:$0xff]
    %v171 = vld [vmem:[#allocation9 + $0x38] sm:$0xff]
    %172 = vmatprep.subr.mxu0 0.0
    %173 = vmatpush1.msra.mxu0 %v164
    %174 = vmatprep.subr.mxu0 0.0
    %175 = vmatpush1.msra.mxu0 %v165
    %176 = vmatprep.subr.mxu0 0.0
    %177 = vmatpush1.msra.mxu0 %v166
    %178 = vmatprep.subr.mxu0 0.0
    %179 = vmatpush1.msra.mxu0 %v167
    %180 = vmatprep.subr.mxu0 0.0
    %181 = vmatpush1.msra.mxu0 %v168
    %182 = vmatprep.subr.mxu0 0.0
    %183 = vmatpush1.msra.mxu0 %v169
    %184 = vmatprep.subr.mxu0 0.0
    %185 = vmatpush1.msra.mxu0 %v170
    %186 = vmatprep.subr.mxu0 0.0
    %187 = vmatpush1.msra.mxu0 %v171
    %188 = vmatprep.subr.mxu0 0.0
    %189 = vmatpush1.msra.mxu0 0.0
    %190 = vmatprep.subr.mxu0 0.0
    %191 = vmatpush1.msra.mxu0 0.0
    %192 = vmatprep.subr.mxu0 0.0
    %193 = vmatpush1.msra.mxu0 0.0
    %194 = vmatprep.subr.mxu0 0.0
    %195 = vmatpush1.msra.mxu0 0.0
    %196 = vmatprep.subr.mxu0 0.0
    %197 = vmatpush1.msra.mxu0 0.0
    %198 = vmatprep.subr.mxu0 0.0
    %199 = vmatpush1.msra.mxu0 0.0
    %200 = vmatprep.subr.mxu0 0.0
    %201 = vmatpush1.msra.mxu0 0.0
    %202 = vmatprep.subr.mxu0 0.0
    %203 = vmatpush1.msra.mxu0 0.0
    %204 = vmatprep.subr.mxu0 0.0
    %205 = vmatpush1.msra.mxu0 0.0
    %206 = vmatprep.subr.mxu0 0.0
    %207 = vmatpush1.msra.mxu0 0.0
    %208 = vmatprep.subr.mxu0 0.0
    %209 = vmatpush1.msra.mxu0 0.0
    %210 = vmatprep.subr.mxu0 0.0
    %211 = vmatpush1.msra.mxu0 0.0
    %212 = vmatprep.subr.mxu0 0.0
    %213 = vmatpush1.msra.mxu0 0.0
    %214 = vmatprep.subr.mxu0 0.0
    %215 = vmatpush1.msra.mxu0 0.0
    %216 = vmatprep.subr.mxu0 0.0
    %217 = vmatpush1.msra.mxu0 0.0
    %218 = vmatprep.subr.mxu0 0.0
    %219 = vmatpush1.msra.mxu0 0.0
    %220 = vmatprep.subr.mxu0 0.0
    %221 = vmatpush1.msra.mxu0 0.0
    %222 = vmatprep.subr.mxu0 0.0
    %223 = vmatpush1.msra.mxu0 0.0
    %224 = vmatprep.subr.mxu0 0.0
    %225 = vmatpush1.msra.mxu0 0.0
    %226 = vmatprep.subr.mxu0 0.0
    %227 = vmatpush1.msra.mxu0 0.0
    %228 = vmatprep.subr.mxu0 0.0
    %229 = vmatpush1.msra.mxu0 0.0
    %230 = vmatprep.subr.mxu0 0.0
    %231 = vmatpush1.msra.mxu0 0.0
    %232 = vmatprep.subr.mxu0 0.0
    %233 = vmatpush1.msra.mxu0 0.0
    %234 = vmatprep.subr.mxu0 0.0
    %235 = vmatpush1.msra.mxu0 0.0
    %236 = vmatprep.mubr.f32.mxu0 0.0
    %237 = vmatmul.mubr.f32.gmra.mrb[0].mxu0 %v78
    %v238 = vpop.f32.mrb[0].mxu0
    %v239 = vadd.f32 0.0, %v238
    %v240 = vpop.f32.mrb[0].mxu0
    %241 = vmatprep.mubr.f32.mxu0 0.0
    %242 = vmatmul.mubr.f32.gmra.mrb[0].mxu0 %v81
    %v243 = vpop.f32.mrb[0].mxu0
    %v244 = vadd.f32 0.0, %v243
    %v245 = vpop.f32.mrb[0].mxu0
    %246 = vdwg.mxu0
    %v247 = vadd.f32 %v162, %v239
    %v248 = vadd.f32 %v163, %v244
    %249 = vst [vmem:[#allocation3] sm:$0xff] %v247
    %250 = vst [vmem:[#allocation3 + $0x8] sm:$0xff] %v248
    // Predicated region
    $region30: #{tpu_custom_call.1} parent=1 // pred_check
      %p251 = pneg %p56
    $region31: #{tpu_custom_call.1} parent=1 // pred_check_branch
      %253 = sbr.rel (%p251) target = $region33
    $region32: #{tpu_custom_call.1} parent=1 // pred_region
      %v254 = vld [vmem:[#allocation2] sm:$0xff]
      %v255 = vld [vmem:[#allocation2 + $0x8] sm:$0xff]
      %v256 = vsub.f32 0.0, %v254
      %v257 = vsub.f32 0.0, %v255
      %v258 = vmul.f32 %v256, 1.442695
      %v259 = vpow.pop %v258
      %v260 = vmul.f32 %v257, 1.442695
      %v261 = vpow.pop %v260
      %v262 = vadd.f32 %v259, 1.0
      %v263 = vadd.f32 %v261, 1.0
      %v264 = vrcp.pop %v262
      %v265 = vmul.f32 1.0, %v264
      %v266 = vrcp.pop %v263
      %v267 = vmul.f32 1.0, %v266
      %v268 = vmul.f32 %v254, %v265
      %v269 = vmul.f32 %v255, %v267
      %v270 = vld [vmem:[#allocation3] sm:$0xff]
      %v271 = vld [vmem:[#allocation3 + $0x8] sm:$0xff]
      %v272 = vmul.f32 %v268, %v270
      %v273 = vmul.f32 %v269, %v271
      %274 = vst [vmem:[#allocation10] sm:$0xff] %v272
      %275 = vst [vmem:[#allocation10 + $0x8] sm:$0xff] %v273
    $region33: #{tpu_custom_call.1} parent=1 // pred_fallthru
      _
    // Predicated region
    $region34: #{tpu_custom_call.1} parent=1 // pred_check
      _
    $region35: #{tpu_custom_call.1} parent=1 // pred_check_branch
      %277 = sbr.rel (0) target = $region37
    $region36: #{tpu_custom_call.1} parent=1 // pred_region
      %s279 = ssub.s32 256, 256
      %280 = vsyncadd [#allocation6], %s279
      %s281 = sshll.u32 [#allocation10], 4
      %s282 = int_to_ptr.vmem [resolvable:$true] %s281
      %287 = dma.vmem_to_hbm [thread:$0]  %s282, 256, %s3, [#allocation6], 128, 128, 8
    $region37: #{tpu_custom_call.1} parent=1 // pred_fallthru
      _
    // Predicated region
    $region38: #{tpu_custom_call.1} parent=1 // pred_check
      _
    $region39: #{tpu_custom_call.1} parent=1 // pred_check_branch
      %289 = sbr.rel (0) target = $region41
    $region40: #{tpu_custom_call.1} parent=1 // pred_region
      %290 = dma.done [#allocation6], 256
    $region41: #{tpu_custom_call.1} parent=1 // pred_fallthru
      _
    %291 = vsyncpa [#allocation5], 1
    %292 = vsyncpa [#allocation8], 1
    %293 = vsyncpa [#allocation6], 1

</llo_original>
